<compile_context>
chip_gen: v6e
topology: v6e:2x2x1
jax: 0.10.0
libtpu: 0.0.40
codegen_flags: <defaults>
</compile_context>

<pallas_src>
import functools

import jax
import jax.numpy as jnp
from jax import lax
from jax.experimental import pallas as pl
from jax.experimental.pallas import tpu as pltpu


def _round_up(x: int, m: int) -> int:
    return (x + m - 1) // m * m


def _recip(v):
    # EUP approximate reciprocal + one Newton refinement step: near-f32
    # accuracy while keeping the divide off the VPU's full divide sequence.
    r = pl.reciprocal(v, approx=True)
    return r * (2.0 - v * r)


def _pow_neg(u, alpha: float):
    """u ** (-(alpha+1)/2) for u >= 1, with recip/rsqrt fast paths."""
    half = (float(alpha) + 1.0) * 0.5            # positive exponent magnitude
    n = int(round(half))
    if abs(half - n) < 1e-9 and 1 <= n <= 8:
        # Integer power (alpha = 1, 3, 5, ...): u^-n = recip(u)^n, zero/1 EUP op.
        r = _recip(u)
        out = r
        for _ in range(n - 1):
            out = out * r
        return out
    m = int(round(2.0 * half))
    if abs(2.0 * half - m) < 1e-9 and 1 <= m <= 17:
        # Half-integer power (alpha = 2, 4, ...): u^-(k+1/2) = rsqrt(u)*recip(u)^k.
        k = (m - 1) // 2
        out = lax.rsqrt(u)
        if k > 0:
            r = _recip(u)
            for _ in range(k):
                out = out * r
        return out
    # General fallback: 2 EUP pushes per element.
    return jnp.exp(-half * jnp.log(u))


def _fairoid_kernel(x_ref, ct_ref, csq_ref, o_ref, *, alpha: float,
                    inv_alpha: float):
    # x_ref:   (tb, D)  batch tile of input cluster centers (native dtype)
    # ct_ref:  (D, K)   fairoid centers^T pre-scaled by -2/alpha (wrapper)
    # csq_ref: (1, K)   ||fairoid||^2/alpha + 1, precomputed in the wrapper
    # o_ref:   (tb, K)  f32 output tile (K == full fairoid count, no padding)
    x = x_ref[...]
    xf = x.astype(jnp.float32)

    # u = 1 + ||x - c||^2 / alpha
    #   = (||x||^2/alpha) + x @ (-2 c^T/alpha) + (||c||^2/alpha + 1)
    # Cross term hits the MXU; the affine constants were folded in the wrapper.
    x_sq = jnp.sum(xf * xf, axis=1, keepdims=True) * inv_alpha          # (tb, 1)
    cross = jnp.dot(x, ct_ref[...], preferred_element_type=jnp.float32)  # (tb, K)
    # max with 1.0 == clamping dist >= 0 (guards matmul-expansion cancellation).
    u = jnp.maximum(x_sq + cross + csq_ref[...], 1.0)                    # (tb, K)

    num = _pow_neg(u, alpha)                                             # (tb, K)
    denom = jnp.sum(num, axis=1, keepdims=True)                          # (tb, 1)
    o_ref[...] = (num * _recip(denom)).astype(o_ref.dtype)


def _vmem_budget():
    # Per-generation budget: ~70% of physical VMEM for tile selection, scoped
    # compiler limit slightly above it (v5e/v6e: 128 MiB -> ~90/103 MiB;
    # v7x: 64 MiB -> ~45/51 MiB).
    try:
        cap = int(pltpu.get_tpu_info().vmem_capacity_bytes)
    except Exception:
        cap = 64 << 20      # conservative (v7x-sized) if the query is unavailable
    budget = int(cap * 0.70)
    limit = min(int(budget * 1.15), int(cap * 0.90))
    return budget, limit


def _choose_tile(B: int, D: int, K: int, tb_request: int,
                 budget_bytes: int, x_itemsize: int) -> int:
    # Largest batch tile that (a) is a multiple of 8, (b) doesn't exceed the
    # (8-padded) batch, (c) keeps >= 4 grid steps on large batches so each of
    # v7x's two TensorCores gets >= 2 pipelined steps, and (d) fits the VMEM
    # budget including double buffers, resident centers and the f32 temporaries.
    tb = max(8, min(_round_up(tb_request, 8), _round_up(B, 8)))
    if B >= 512:
        tb = min(tb, _round_up(-(-B // 4), 8))          # >= 4 grid steps

    Dl = _round_up(D, 128)          # lane-padded widths as laid out in VMEM
    Kl = _round_up(K, 128)
    resident = 2 * Dl * Kl * x_itemsize + 8 * Kl * 4    # ct (2 bufs) + csq

    def vmem_bytes(t):
        io = 2 * t * Dl * x_itemsize + 2 * t * Kl * 4   # dbl-buffered x in / out
        work = 4 * t * Kl * 4                           # cross/u/num/phi temporaries
        return io + work + resident

    while tb > 8 and vmem_bytes(tb) > budget_bytes:
        tb = max(8, _round_up(tb // 2, 8))
    return tb


def fairoid_layer_forward(cluster_centers, fairoid_centers, alpha: float, *,
                          tb: int = 1024):
    """phi = FairoidLayer(cluster_centers): (B, D) x (K, D) -> (B, K) float32."""
    B, D = cluster_centers.shape
    K, D2 = fairoid_centers.shape
    assert D == D2, "latent size mismatch"
    alpha = float(alpha)

    # bf16 inputs stay bf16 for the MXU cross term (halves the x DMA, native
    # MXU rate); everything else stays f32.  f32 inputs keep the f32 path.
    mm_dtype = jnp.bfloat16 if cluster_centers.dtype == jnp.bfloat16 else jnp.float32
    x = cluster_centers.astype(mm_dtype)
    fc = fairoid_centers.astype(jnp.float32)

    # Fold the affine constants into the wrapper-side operands (hoisted, done
    # once instead of every grid step):
    #   ct  = -2/alpha * fc^T        (D, K)
    #   csq = ||fc||^2/alpha + 1     (1, K)
    ct = (fc.T * (-2.0 / alpha)).astype(mm_dtype)
    csq = (jnp.sum(fc * fc, axis=1) * (1.0 / alpha) + 1.0)[None, :]

    budget, vmem_limit = _vmem_budget()
    itemsize = jnp.dtype(mm_dtype).itemsize
    tb = _choose_tile(B, D, K, tb, budget, itemsize)
    Bp = _round_up(B, tb)
    x_p = x if Bp == B else jnp.pad(x, ((0, Bp - B), (0, 0)))

    kernel = functools.partial(_fairoid_kernel, alpha=alpha,
                               inv_alpha=1.0 / alpha)

    out = pl.pallas_call(
        kernel,
        out_shape=jax.ShapeDtypeStruct((Bp, K), jnp.float32),
        grid_spec=pltpu.PrefetchScalarGridSpec(
            num_scalar_prefetch=0,
            grid=(Bp // tb,),
            in_specs=[
                pl.BlockSpec((tb, D), lambda i: (i, 0)),   # batch-tiled x
                pl.BlockSpec((D, K), lambda i: (0, 0)),    # resident -2/alpha * c^T
                pl.BlockSpec((1, K), lambda i: (0, 0)),    # resident ||c||^2/alpha + 1
            ],
            out_specs=pl.BlockSpec((tb, K), lambda i: (i, 0)),
        ),
        compiler_params=pltpu.CompilerParams(
            dimension_semantics=("parallel",),
            vmem_limit_bytes=vmem_limit),
        cost_estimate=pl.CostEstimate(
            flops=2 * Bp * D * K + 3 * Bp * D + 10 * Bp * K,
            transcendentals=2 * Bp * K,
            bytes_accessed=(Bp * D + D * K) * itemsize + 4 * (K + Bp * K)),
    )(x_p, ct, csq)

    return out if Bp == B else out[:B]


def _reference(x, centers, alpha):
    # Pure-JAX reference mirroring the PyTorch module exactly.
    xf = x.astype(jnp.float32)
    cf = centers.astype(jnp.float32)
    dist = jnp.sum((xf[:, None, :] - cf[None, :, :]) ** 2, axis=2)
    num = (1.0 + dist / alpha) ** (-(alpha + 1.0) / 2.0)
    denom = jnp.sum(num, axis=1)
    return ((num.T / denom).T).astype(jnp.float32)


if __name__ == "__main__":
    key = jax.random.PRNGKey(0)
    kx, kc = jax.random.split(key)

    B, D, K = 16, 32, 8          # n input cluster centers, latent_size, n fairoids
    cluster_centers = jax.random.normal(kx, (B, D), dtype=jnp.float32)

    # Deterministic xavier_uniform_-style init for fairoid_centers (shape
    # (K, D)), mirroring the module's host-side param init when None is passed.
    bound = (6.0 / (K + D)) ** 0.5
    fairoid_centers = jax.random.uniform(
        kc, (K, D), dtype=jnp.float32, minval=-bound, maxval=bound)

    # alpha=1: pure reciprocal path; alpha=2: rsqrt*recip half-integer path;
    # alpha=2.5: general exp/log fallback.
    for alpha in (1.0, 2.0, 2.5):
        phi = jax.block_until_ready(
            fairoid_layer_forward(cluster_centers, fairoid_centers, alpha))
        phi_ref = _reference(cluster_centers, fairoid_centers, alpha)
        assert phi.shape == (B, K)
        assert jnp.allclose(phi, phi_ref, atol=1e-5, rtol=1e-4), \
            f"alpha={alpha} mismatch"

    print("KERNEL_OK")
</pallas_src>

<mosaic_0001>
module attributes {stable_mosaic.version = 11 : i64} {
  func.func @_fairoid_kernel(%arg0: i32, %arg1: memref<16x32xf32, #tpu.memory_space<vmem>>, %arg2: memref<32x8xf32, #tpu.memory_space<vmem>>, %arg3: memref<1x8xf32, #tpu.memory_space<vmem>>, %arg4: memref<16x8xf32, #tpu.memory_space<vmem>>) attributes {dimension_semantics = [#tpu.dimension_semantics<parallel>], iteration_bounds = array<i64: 1>, scalar_prefetch = 0 : i64, scratch_operands = 0 : i64, tpu.core_type = #tpu.core_type<tc>, window_params = [{transform_indices = @transform_0, window_bounds = array<i64: 16, 32>}, {pipeline_mode = #tpu.pipeline_mode<synchronous>, transform_indices = @transform_1, window_bounds = array<i64: 32, 8>}, {pipeline_mode = #tpu.pipeline_mode<synchronous>, transform_indices = @transform_2, window_bounds = array<i64: 1, 8>}, {transform_indices = @transform_3, window_bounds = array<i64: 16, 8>}]} {
    %c0 = arith.constant 0 : index
    %c0_0 = arith.constant 0 : index
    %0 = vector.load %arg1[%c0, %c0_0] : memref<16x32xf32, #tpu.memory_space<vmem>>, vector<16x32xf32>
    %1 = arith.mulf %0, %0 : vector<16x32xf32>
    %cst = arith.constant dense<0.000000e+00> : vector<16xf32>
    %2 = vector.multi_reduction <add>, %1, %cst [1] : vector<16x32xf32> to vector<16xf32>
    %3 = vector.shape_cast %2 : vector<16xf32> to vector<16x1xf32>
    %cst_1 = arith.constant 1.000000e+00 : f32
    %4 = vector.broadcast %cst_1 : f32 to vector<16x1xf32>
    %5 = arith.mulf %3, %4 : vector<16x1xf32>
    %c0_2 = arith.constant 0 : index
    %c0_3 = arith.constant 0 : index
    %6 = vector.load %arg2[%c0_2, %c0_3] : memref<32x8xf32, #tpu.memory_space<vmem>>, vector<32x8xf32>
    %cst_4 = arith.constant dense<0.000000e+00> : vector<16x8xf32>
    %7 = tpu.matmul %0, %6, %cst_4 {dimension_numbers = #tpu.dot_dimension_numbers<[1], [0], [0], [1], [0, 0, 1, 1], [], []>} : vector<16x32xf32>, vector<32x8xf32>, vector<16x8xf32> -> vector<16x8xf32>
    %8 = vector.broadcast %5 : vector<16x1xf32> to vector<16x8xf32>
    %9 = arith.addf %8, %7 : vector<16x8xf32>
    %c0_5 = arith.constant 0 : index
    %c0_6 = arith.constant 0 : index
    %10 = vector.load %arg3[%c0_5, %c0_6] : memref<1x8xf32, #tpu.memory_space<vmem>>, vector<1x8xf32>
    %11 = vector.broadcast %10 : vector<1x8xf32> to vector<16x8xf32>
    %12 = arith.addf %9, %11 : vector<16x8xf32>
    %cst_7 = arith.constant 1.000000e+00 : f32
    %13 = vector.broadcast %cst_7 : f32 to vector<16x8xf32>
    %14 = arith.maximumf %12, %13 : vector<16x8xf32>
    %15 = tpu.reciprocal %14 {approx = true} : vector<16x8xf32> -> vector<16x8xf32>
    %16 = arith.mulf %14, %15 : vector<16x8xf32>
    %cst_8 = arith.constant 2.000000e+00 : f32
    %17 = vector.broadcast %cst_8 : f32 to vector<16x8xf32>
    %18 = arith.subf %17, %16 : vector<16x8xf32>
    %19 = arith.mulf %15, %18 : vector<16x8xf32>
    %cst_9 = arith.constant dense<0.000000e+00> : vector<16xf32>
    %20 = vector.multi_reduction <add>, %19, %cst_9 [1] : vector<16x8xf32> to vector<16xf32>
    %21 = vector.shape_cast %20 : vector<16xf32> to vector<16x1xf32>
    %22 = tpu.reciprocal %21 {approx = true} : vector<16x1xf32> -> vector<16x1xf32>
    %23 = arith.mulf %21, %22 : vector<16x1xf32>
    %cst_10 = arith.constant 2.000000e+00 : f32
    %24 = vector.broadcast %cst_10 : f32 to vector<16x1xf32>
    %25 = arith.subf %24, %23 : vector<16x1xf32>
    %26 = arith.mulf %22, %25 : vector<16x1xf32>
    %27 = vector.broadcast %26 : vector<16x1xf32> to vector<16x8xf32>
    %28 = arith.mulf %19, %27 : vector<16x8xf32>
    %c0_11 = arith.constant 0 : index
    %c0_12 = arith.constant 0 : index
    %29 = vector.load %arg4[%c0_11, %c0_12] : memref<16x8xf32, #tpu.memory_space<vmem>>, vector<16x8xf32>
    tpu.vector_store %arg4[%c0_11, %c0_12], %28 {strides = array<i32>} : memref<16x8xf32, #tpu.memory_space<vmem>>, vector<16x8xf32>,
    return
  }
  func.func @transform_0(%arg0: i32) -> (i32, i32) {
    %c0_i32 = arith.constant 0 : i32
    %c0_i32_0 = arith.constant 0 : i32
    return %arg0, %c0_i32 : i32, i32
  }
  func.func @transform_1(%arg0: i32) -> (i32, i32) {
    %c0_i32 = arith.constant 0 : i32
    %c0_i32_0 = arith.constant 0 : i32
    %c0_i32_1 = arith.constant 0 : i32
    return %c0_i32, %c0_i32_0 : i32, i32
  }
  func.func @transform_2(%arg0: i32) -> (i32, i32) {
    %c0_i32 = arith.constant 0 : i32
    %c0_i32_0 = arith.constant 0 : i32
    %c0_i32_1 = arith.constant 0 : i32
    return %c0_i32, %c0_i32_0 : i32, i32
  }
  func.func @transform_3(%arg0: i32) -> (i32, i32) {
    %c0_i32 = arith.constant 0 : i32
    %c0_i32_0 = arith.constant 0 : i32
    return %arg0, %c0_i32 : i32, i32
  }
}

</mosaic_0001>

<llo_original>
// kernel: tpu_custom_call.1
$region0: #{tpu_custom_call.1}
  #allocation0 [shape = 'u32[]', space=smem, size = 0x4, offset = 0x4, fixed_abs, tag = 'smem constant byte address 0x4 - core index']
  #allocation1 [shape = 'u32[144,128]{1,0:T(1,128)}', space=vmem, size = 0x12000, scoped, tag = 'internal scratch']
  %s0 = inlined_call_operand.vmem [shape: f32[16,32], index: 0, kind: input, shape index: {}]
  %s1 = inlined_call_operand.vmem [shape: f32[32,8], index: 1, kind: input, shape index: {}]
  %s2 = inlined_call_operand.vmem [shape: f32[1,8], index: 2, kind: input, shape index: {}]
  %s3 = inlined_call_operand.vmem [shape: f32[16,8], index: 3, kind: output, shape index: {}]
  %s4 = sld [smem:[#allocation0]]
  $region22: #{tpu_custom_call.1} parent=0
    _
  %s6 = ssub.s32 1, %s4
  %s7 = scalar_select 0, %s6, %s4
  // Predicated region
  $region2: #{tpu_custom_call.1} parent=0 // pred_check
    _
  $region3: #{tpu_custom_call.1} parent=0 // pred_check_branch
    %9 = sbr.rel (0) target = $region5
  $region4: #{tpu_custom_call.1} parent=0 // pred_region
    _
  $region5: #{tpu_custom_call.1} parent=0 // pred_fallthru
    _
  // Predicated region
  $region6: #{tpu_custom_call.1} parent=0 // pred_check
    _
  $region7: #{tpu_custom_call.1} parent=0 // pred_check_branch
    %11 = sbr.rel (0) target = $region9
  $region8: #{tpu_custom_call.1} parent=0 // pred_region
    _
  $region9: #{tpu_custom_call.1} parent=0 // pred_fallthru
    _
  // Predicated region
  $region10: #{tpu_custom_call.1} parent=0 // pred_check
    _
  $region11: #{tpu_custom_call.1} parent=0 // pred_check_branch
    %13 = sbr.rel (0) target = $region13
  $region12: #{tpu_custom_call.1} parent=0 // pred_region
    _
  $region13: #{tpu_custom_call.1} parent=0 // pred_fallthru
    _
  %v14 = vld [vmem:[%s0] sm:$0xff]
  %v15 = vld [vmem:[%s0 + $0x8] sm:$0xff]
  %v16 = vmul.f32 %v14, %v14
  %v17 = vmul.f32 %v15, %v15
  %vm18 = vcmask 261120
  %v19 = vsel %vm18, %v16, 0.0
  %20 = vadd.xlane.f32.xlu0 %v19
  %v21 = vpop.xlane.xlu0 %20
  %v22 = vsel %vm18, %v17, 0.0
  %23 = vadd.xlane.f32.xlu0 %v22
  %v24 = vpop.xlane.xlu0 %23
  %v25 = vld [vmem:[%s1] sm:$0xff]
  %v26 = vld [vmem:[%s1 + $0x8] sm:$0xff]
  %v27 = vld [vmem:[%s1 + $0x10] sm:$0xff]
  %v28 = vld [vmem:[%s1 + $0x18] sm:$0xff]
  %v30 = vsel %vm18, %v14, 0
  %v33 = vsel %vm18, %v15, 0
  %35 = vmatprep.subr.mxu0 0.0
  %36 = vmatpush1.msra.mxu0 0.0
  %37 = vmatprep.subr.mxu0 0.0
  %38 = vmatpush1.msra.mxu0 0.0
  %39 = vmatprep.subr.mxu0 0.0
  %40 = vmatpush1.msra.mxu0 0.0
  %41 = vmatprep.subr.mxu0 0.0
  %42 = vmatpush1.msra.mxu0 0.0
  %43 = vmatprep.subr.mxu0 0.0
  %44 = vmatpush1.msra.mxu0 0.0
  %45 = vmatprep.subr.mxu0 0.0
  %46 = vmatpush1.msra.mxu0 0.0
  %47 = vmatprep.subr.mxu0 0.0
  %48 = vmatpush1.msra.mxu0 0.0
  %49 = vmatprep.subr.mxu0 0.0
  %50 = vmatpush1.msra.mxu0 0.0
  %51 = vmatprep.subr.mxu0 0.0
  %52 = vmatpush1.msra.mxu0 0.0
  %53 = vmatprep.subr.mxu0 0.0
  %54 = vmatpush1.msra.mxu0 0.0
  %55 = vmatprep.subr.mxu0 0.0
  %56 = vmatpush1.msra.mxu0 0.0
  %57 = vmatprep.subr.mxu0 0.0
  %58 = vmatpush1.msra.mxu0 0.0
  %59 = vmatprep.subr.mxu0 0.0
  %60 = vmatpush1.msra.mxu0 %v28
  %61 = vmatprep.subr.mxu0 0.0
  %62 = vmatpush1.msra.mxu0 %v27
  %63 = vmatprep.subr.mxu0 0.0
  %64 = vmatpush1.msra.mxu0 %v26
  %65 = vmatprep.subr.mxu0 0.0
  %66 = vmatpush1.msra.mxu0 %v25
  %67 = vmatprep.subr.mxu0 0.0
  %68 = vmatpush2.msra.mxu0 0.0
  %69 = vmatprep.subr.mxu0 0.0
  %70 = vmatpush2.msra.mxu0 0.0
  %71 = vmatprep.subr.mxu0 0.0
  %72 = vmatpush2.msra.mxu0 0.0
  %73 = vmatprep.subr.mxu0 0.0
  %74 = vmatpush2.msra.mxu0 0.0
  %75 = vmatprep.subr.mxu0 0.0
  %76 = vmatpush2.msra.mxu0 0.0
  %77 = vmatprep.subr.mxu0 0.0
  %78 = vmatpush2.msra.mxu0 0.0
  %79 = vmatprep.subr.mxu0 0.0
  %80 = vmatpush2.msra.mxu0 0.0
  %81 = vmatprep.subr.mxu0 0.0
  %82 = vmatpush2.msra.mxu0 0.0
  %83 = vmatprep.subr.mxu0 0.0
  %84 = vmatpush2.msra.mxu0 0.0
  %85 = vmatprep.subr.mxu0 0.0
  %86 = vmatpush2.msra.mxu0 0.0
  %87 = vmatprep.subr.mxu0 0.0
  %88 = vmatpush2.msra.mxu0 0.0
  %89 = vmatprep.subr.mxu0 0.0
  %90 = vmatpush2.msra.mxu0 0.0
  %91 = vmatprep.subr.mxu0 0.0
  %92 = vmatpush2.msra.mxu0 0.0
  %93 = vmatprep.subr.mxu0 0.0
  %94 = vmatpush2.msra.mxu0 0.0
  %95 = vmatprep.subr.mxu0 0.0
  %96 = vmatpush2.msra.mxu0 0.0
  %97 = vmatprep.subr.mxu0 0.0
  %98 = vmatpush2.msra.mxu0 0.0
  %99 = vmatprep.mubr.f32.mxu0 0.0
  %100 = vmatmul.mubr.f32.gmra.mxu0 %v30
  %v101 = vpop.f32.mrf.mxu0
  %v102 = vadd.f32 0.0, %v101
  %v103 = vpop.f32.mrf.mxu0
  %104 = vmatprep.mubr.f32.mxu0 0.0
  %105 = vmatmul.mubr.f32.gmra.mxu0 %v33
  %v106 = vpop.f32.mrf.mxu0
  %v107 = vadd.f32 0.0, %v106
  %v108 = vpop.f32.mrf.mxu0
  %109 = vdwg.mxu0
  %v110 = vadd.f32 %v21, %v102
  %v111 = vadd.f32 %v24, %v107
  %v112 = vld [vmem:[%s2] sm:$0x1]
  %v114 = vlaneseq
  %v115 = vshrl.u32 %v114, 7
  %v116 = vsub.s32 0, %v115
  %v117 = vrot.slane %v112, %v116
  %v119 = vadd.f32 %v110, %v117
  %v120 = vadd.f32 %v111, %v117
  %v121 = vmax.f32 %v119, 1.0
  %v122 = vmax.f32 %v120, 1.0
  %v123 = vrcp.pop %v121
  %v124 = vrcp.pop %v122
  %v125 = vmul.f32 %v121, %v123
  %v126 = vmul.f32 %v122, %v124
  %v127 = vsub.f32 2.0, %v125
  %v128 = vsub.f32 2.0, %v126
  %v129 = vmul.f32 %v123, %v127
  %v130 = vmul.f32 %v124, %v128
  %vm131 = vcmask 64512
  %v132 = vsel %vm131, %v129, 0.0
  %133 = vadd.xlane.f32.xlu0 %v132
  %v134 = vpop.xlane.xlu0 %133
  %v135 = vsel %vm131, %v130, 0.0
  %136 = vadd.xlane.f32.xlu0 %v135
  %v137 = vpop.xlane.xlu0 %136
  %v138 = vrcp.pop %v134
  %v139 = vrcp.pop %v137
  %v140 = vmul.f32 %v134, %v138
  %v141 = vmul.f32 %v137, %v139
  %v142 = vsub.f32 2.0, %v140
  %v143 = vsub.f32 2.0, %v141
  %v144 = vmul.f32 %v138, %v142
  %v145 = vmul.f32 %v139, %v143
  %v146 = vmul.f32 %v129, %v144
  %v147 = vmul.f32 %v130, %v145
  %148 = vst.msk [vmem:[%s3] sm:$0xff] %vm131, %v146
  %149 = vst.msk [vmem:[%s3 + $0x8] sm:$0xff] %vm131, %v147
  // Predicated region
  $region14: #{tpu_custom_call.1} parent=0 // pred_check
    _
  $region15: #{tpu_custom_call.1} parent=0 // pred_check_branch
    %151 = sbr.rel (0) target = $region17
  $region16: #{tpu_custom_call.1} parent=0 // pred_region
    _
  $region17: #{tpu_custom_call.1} parent=0 // pred_fallthru
    _
  // Predicated region
  $region18: #{tpu_custom_call.1} parent=0 // pred_check
    _
  $region19: #{tpu_custom_call.1} parent=0 // pred_check_branch
    %153 = sbr.rel (0) target = $region21
  $region20: #{tpu_custom_call.1} parent=0 // pred_region
    _
  $region21: #{tpu_custom_call.1} parent=0 // pred_fallthru
    _

</llo_original>
